<compile_context>
chip_gen: v7x
topology: tpu7x:2x2x1
jax: 0.10.0
libtpu: 0.0.40
codegen_flags: <defaults>
</compile_context>

<pallas_src>
import functools

import jax
import jax.numpy as jnp
from jax.experimental import pallas as pl
from jax.experimental.pallas import tpu as pltpu


def _round_up(x, m):
    return ((x + m - 1) // m) * m


def _gaussian_smearing_kernel(dist_ref, out_ref, *, coeff, start, step,
                              num_gaussians):
    # dist_ref: (tile_m, 1) block of distances
    # out_ref:  (tile_m, G) output block
    # Gaussian centers are grid-invariant -> regenerate from iota instead of
    # DMA-ing a (1, G) input every step.
    g_idx = jax.lax.broadcasted_iota(jnp.int32, (1, num_gaussians), 1)
    offset = start + step * g_idx.astype(jnp.float32)          # (1, G)
    d = dist_ref[...] - offset                                  # (tile_m, G)
    out_ref[...] = jnp.exp(coeff * d * d).astype(out_ref.dtype)


def gaussian_smearing(dist, *, start, step, coeff, num_gaussians,
                      tile_m=2048, out_dtype=jnp.float32):
    """dist: (N,) -> (N, num_gaussians) Gaussian-smeared distances."""
    n = int(dist.shape[0])
    g = int(num_gaussians)

    # Tile sizing: as large as possible (amortize per-step overhead), but never
    # larger than needed for small N; always a multiple of 8 (sublane tiling).
    tm = min(int(tile_m), _round_up(max(n, 1), 8))
    tm = _round_up(tm, 8)
    n_pad = _round_up(max(n, 1), tm)

    dist_f32 = dist.astype(jnp.float32)
    if n_pad != n:
        dist_f32 = jnp.pad(dist_f32, (0, n_pad - n))
    dist2d = dist_f32.reshape(n_pad, 1)

    kernel = functools.partial(
        _gaussian_smearing_kernel,
        coeff=float(coeff), start=float(start), step=float(step),
        num_gaussians=g)

    out = pl.pallas_call(
        kernel,
        out_shape=jax.ShapeDtypeStruct((n_pad, g), out_dtype),
        grid_spec=pltpu.PrefetchScalarGridSpec(
            num_scalar_prefetch=0,
            grid=(n_pad // tm,),
            in_specs=[pl.BlockSpec((tm, 1), lambda i: (i, 0))],
            out_specs=pl.BlockSpec((tm, g), lambda i: (i, 0)),
        ),
        compiler_params=pltpu.CompilerParams(
            dimension_semantics=("parallel",),
        ),
    )(dist2d)

    if n_pad != n:
        out = out[:n]
    return out


class GaussianSmearingJAX:
    """JAX/Pallas re-implementation of the PyTorch GaussianSmearing module."""

    def __init__(self, start=0.0, stop=5.0, num_gaussians=50):
        self.start = float(start)
        self.stop = float(stop)
        self.num_gaussians = int(num_gaussians)
        self.offset = jnp.linspace(start, stop, num_gaussians,
                                   dtype=jnp.float32)
        # Match PyTorch: coeff derived from the float32 linspace step.
        self.step = float(self.offset[1] - self.offset[0])
        self.coeff = -0.5 / self.step ** 2

    def __call__(self, dist, out_dtype=jnp.float32):
        # PyTorch does dist.view(-1, 1); accept any shape and flatten.
        flat = jnp.asarray(dist, jnp.float32).reshape(-1)
        return gaussian_smearing(
            flat,
            start=self.start, step=self.step, coeff=self.coeff,
            num_gaussians=self.num_gaussians, out_dtype=out_dtype)


def _reference(dist, offset, coeff):
    d = dist.reshape(-1, 1) - offset.reshape(1, -1)
    return jnp.exp(coeff * d * d)


if __name__ == "__main__":
    key = jax.random.PRNGKey(0)
    module = GaussianSmearingJAX(start=0.0, stop=5.0, num_gaussians=50)

    # --- small case: single block, no padding needed ---
    dist = jax.random.uniform(key, (64,), dtype=jnp.float32,
                              minval=0.0, maxval=5.0)
    out = jax.block_until_ready(module(dist))
    ref = _reference(dist, module.offset, module.coeff)
    assert out.shape == (64, 50), out.shape
    assert jnp.allclose(out, ref, atol=1e-5, rtol=1e-4), "mismatch (N=64)"

    # --- multi-block case: exercises grid > 1, padding, and slice-off ---
    k2 = jax.random.PRNGKey(1)
    dist2 = jax.random.uniform(k2, (300,), dtype=jnp.float32,
                               minval=0.0, maxval=5.0)
    out2 = gaussian_smearing(
        dist2, start=module.start, step=module.step, coeff=module.coeff,
        num_gaussians=module.num_gaussians, tile_m=128)
    out2 = jax.block_until_ready(out2)
    ref2 = _reference(dist2, module.offset, module.coeff)
    assert out2.shape == (300, 50), out2.shape
    assert jnp.allclose(out2, ref2, atol=1e-5, rtol=1e-4), "mismatch (N=300)"

    print("KERNEL_OK")
</pallas_src>

<mosaic_0001>
module attributes {stable_mosaic.version = 11 : i64} {
  func.func @_gaussian_smearing_kernel(%arg0: i32, %arg1: memref<64x1xf32, #tpu.memory_space<vmem>>, %arg2: memref<64x50xf32, #tpu.memory_space<vmem>>) attributes {dimension_semantics = [#tpu.dimension_semantics<parallel>], iteration_bounds = array<i64: 1>, scalar_prefetch = 0 : i64, scratch_operands = 0 : i64, tpu.core_type = #tpu.core_type<tc>, window_params = [{transform_indices = @transform_0, window_bounds = array<i64: 64, 1>}, {transform_indices = @transform_1, window_bounds = array<i64: 64, 50>}]} {
    %0 = tpu.iota {dimensions = array<i32: 1>} : vector<1x50xi32>
    %1 = arith.sitofp %0 : vector<1x50xi32> to vector<1x50xf32>
    %cst = arith.constant 0.102040812 : f32
    %2 = vector.broadcast %cst : f32 to vector<1x50xf32>
    %3 = arith.mulf %2, %1 : vector<1x50xf32>
    %cst_0 = arith.constant 0.000000e+00 : f32
    %4 = vector.broadcast %cst_0 : f32 to vector<1x50xf32>
    %5 = arith.addf %4, %3 : vector<1x50xf32>
    %c0 = arith.constant 0 : index
    %c0_1 = arith.constant 0 : index
    %6 = vector.load %arg1[%c0, %c0_1] : memref<64x1xf32, #tpu.memory_space<vmem>>, vector<64x1xf32>
    %7 = vector.broadcast %6 : vector<64x1xf32> to vector<64x50xf32>
    %8 = vector.broadcast %5 : vector<1x50xf32> to vector<64x50xf32>
    %9 = arith.subf %7, %8 : vector<64x50xf32>
    %cst_2 = arith.constant -48.0200043 : f32
    %10 = vector.broadcast %cst_2 : f32 to vector<64x50xf32>
    %11 = arith.mulf %10, %9 : vector<64x50xf32>
    %12 = arith.mulf %11, %9 : vector<64x50xf32>
    %13 = math.exp %12 : vector<64x50xf32>
    %c0_3 = arith.constant 0 : index
    %c0_4 = arith.constant 0 : index
    %14 = vector.load %arg2[%c0_3, %c0_4] : memref<64x50xf32, #tpu.memory_space<vmem>>, vector<64x50xf32>
    tpu.vector_store %arg2[%c0_3, %c0_4], %13 {strides = array<i32>} : memref<64x50xf32, #tpu.memory_space<vmem>>, vector<64x50xf32>,
    return
  }
  func.func @transform_0(%arg0: i32) -> (i32, i32) {
    %c0_i32 = arith.constant 0 : i32
    %c0_i32_0 = arith.constant 0 : i32
    return %arg0, %c0_i32 : i32, i32
  }
  func.func @transform_1(%arg0: i32) -> (i32, i32) {
    %c0_i32 = arith.constant 0 : i32
    %c0_i32_0 = arith.constant 0 : i32
    return %arg0, %c0_i32 : i32, i32
  }
}

</mosaic_0001>

<llo_original>
// kernel: tpu_custom_call.1
$region0: #{tpu_custom_call.1}
  #allocation0 [shape = 'u32[]', space=smem, size = 0x4, offset = 0x4, fixed_abs, tag = 'smem constant byte address 0x4 - core index']
  #allocation1 [shape = 'u32[144,128]{1,0:T(1,128)}', space=vmem, size = 0x12000, scoped, tag = 'internal scratch']
  %s0 = inlined_call_operand.vmem [shape: f32[64,1], index: 0, kind: input, shape index: {}]
  %s1 = inlined_call_operand.vmem [shape: f32[64,50], index: 1, kind: output, shape index: {}]
  %s2 = sld [smem:[#allocation0]]
  $region14: #{tpu_custom_call.1} parent=0
    _
  %s4 = ssub.s32 1, %s2
  %s5 = scalar_select 0, %s4, %s2
  // Predicated region
  $region2: #{tpu_custom_call.1} parent=0 // pred_check
    _
  $region3: #{tpu_custom_call.1} parent=0 // pred_check_branch
    %7 = sbr.rel (0) target = $region5
  $region4: #{tpu_custom_call.1} parent=0 // pred_region
    _
  $region5: #{tpu_custom_call.1} parent=0 // pred_fallthru
    _
  %v8 = vlaneseq
  %v9 = vand.u32 %v8, 127
  %v10 = vcvt.s32.f32 %v9
  %v11 = vmul.f32 %v10, 0.10204081
  %v12 = vadd.f32 %v11, 0.0
  %v13 = vld [vmem:[%s0] sm:$0xff]
  %v14 = vld [vmem:[%s0 + $0x8] sm:$0xff]
  %v15 = vld [vmem:[%s0 + $0x10] sm:$0xff]
  %v16 = vld [vmem:[%s0 + $0x18] sm:$0xff]
  %v17 = vld [vmem:[%s0 + $0x20] sm:$0xff]
  %v18 = vld [vmem:[%s0 + $0x28] sm:$0xff]
  %v19 = vld [vmem:[%s0 + $0x30] sm:$0xff]
  %v20 = vld [vmem:[%s0 + $0x38] sm:$0xff]
  %22 = vset.pattern.permute.xlu0 0
  %23 = vperm.xlu0 %22, %v13
  %v24 = vpop.permute.xlu0 %23
  %27 = vset.pattern.permute.xlu0 0
  %28 = vperm.xlu0 %27, %v14
  %v29 = vpop.permute.xlu0 %28
  %32 = vset.pattern.permute.xlu0 0
  %33 = vperm.xlu0 %32, %v15
  %v34 = vpop.permute.xlu0 %33
  %37 = vset.pattern.permute.xlu0 0
  %38 = vperm.xlu0 %37, %v16
  %v39 = vpop.permute.xlu0 %38
  %42 = vset.pattern.permute.xlu0 0
  %43 = vperm.xlu0 %42, %v17
  %v44 = vpop.permute.xlu0 %43
  %47 = vset.pattern.permute.xlu0 0
  %48 = vperm.xlu0 %47, %v18
  %v49 = vpop.permute.xlu0 %48
  %52 = vset.pattern.permute.xlu0 0
  %53 = vperm.xlu0 %52, %v19
  %v54 = vpop.permute.xlu0 %53
  %57 = vset.pattern.permute.xlu0 0
  %58 = vperm.xlu0 %57, %v20
  %v59 = vpop.permute.xlu0 %58
  %v61 = vsub.f32 %v24, %v12
  %v62 = vsub.f32 %v29, %v12
  %v63 = vsub.f32 %v34, %v12
  %v64 = vsub.f32 %v39, %v12
  %v65 = vsub.f32 %v44, %v12
  %v66 = vsub.f32 %v49, %v12
  %v67 = vsub.f32 %v54, %v12
  %v68 = vsub.f32 %v59, %v12
  %v69 = vmul.f32 %v61, -48.020004
  %v70 = vmul.f32 %v62, -48.020004
  %v71 = vmul.f32 %v63, -48.020004
  %v72 = vmul.f32 %v64, -48.020004
  %v73 = vmul.f32 %v65, -48.020004
  %v74 = vmul.f32 %v66, -48.020004
  %v75 = vmul.f32 %v67, -48.020004
  %v76 = vmul.f32 %v68, -48.020004
  %v77 = vmul.f32 %v69, %v61
  %v78 = vmul.f32 %v70, %v62
  %v79 = vmul.f32 %v71, %v63
  %v80 = vmul.f32 %v72, %v64
  %v81 = vmul.f32 %v73, %v65
  %v82 = vmul.f32 %v74, %v66
  %v83 = vmul.f32 %v75, %v67
  %v84 = vmul.f32 %v76, %v68
  %v85 = vmul.f32 %v77, 1.442695
  %v86 = vpow.pop %v85
  %v87 = vmul.f32 %v78, 1.442695
  %v88 = vpow.pop %v87
  %v89 = vmul.f32 %v79, 1.442695
  %v90 = vpow.pop %v89
  %v91 = vmul.f32 %v80, 1.442695
  %v92 = vpow.pop %v91
  %v93 = vmul.f32 %v81, 1.442695
  %v94 = vpow.pop %v93
  %v95 = vmul.f32 %v82, 1.442695
  %v96 = vpow.pop %v95
  %v97 = vmul.f32 %v83, 1.442695
  %v98 = vpow.pop %v97
  %v99 = vmul.f32 %v84, 1.442695
  %v100 = vpow.pop %v99
  %vm101 = vcmask 408576
  %102 = vst.msk [vmem:[%s1] sm:$0xff] %vm101, %v86
  %103 = vst.msk [vmem:[%s1 + $0x8] sm:$0xff] %vm101, %v88
  %104 = vst.msk [vmem:[%s1 + $0x10] sm:$0xff] %vm101, %v90
  %105 = vst.msk [vmem:[%s1 + $0x18] sm:$0xff] %vm101, %v92
  %106 = vst.msk [vmem:[%s1 + $0x20] sm:$0xff] %vm101, %v94
  %107 = vst.msk [vmem:[%s1 + $0x28] sm:$0xff] %vm101, %v96
  %108 = vst.msk [vmem:[%s1 + $0x30] sm:$0xff] %vm101, %v98
  %109 = vst.msk [vmem:[%s1 + $0x38] sm:$0xff] %vm101, %v100
  // Predicated region
  $region6: #{tpu_custom_call.1} parent=0 // pred_check
    _
  $region7: #{tpu_custom_call.1} parent=0 // pred_check_branch
    %111 = sbr.rel (0) target = $region9
  $region8: #{tpu_custom_call.1} parent=0 // pred_region
    _
  $region9: #{tpu_custom_call.1} parent=0 // pred_fallthru
    _
  // Predicated region
  $region10: #{tpu_custom_call.1} parent=0 // pred_check
    _
  $region11: #{tpu_custom_call.1} parent=0 // pred_check_branch
    %113 = sbr.rel (0) target = $region13
  $region12: #{tpu_custom_call.1} parent=0 // pred_region
    _
  $region13: #{tpu_custom_call.1} parent=0 // pred_fallthru
    _

</llo_original>
